<compile_context>
chip_gen: v6e
topology: v6e:2x2x1
jax: 0.10.0
libtpu: 0.0.40
codegen_flags: <defaults>
</compile_context>

<pallas_src>
import math
import functools

import jax
import jax.numpy as jnp
from jax import lax
from jax.experimental import pallas as pl
from jax.experimental.pallas import tpu as pltpu

LN_EPS = 1e-5
NEG_INF = -1e30                 # finite "masked" value (avoids inf-inf -> NaN)
COMPUTE_DTYPE = jnp.bfloat16    # matmul-input dtype; accumulation is float32

# Preferred tile sizes (multiples of 128 on lane dims, 16 on sublane dims).
TM_PREF = 512     # activation rows (sublane)
TN_PREF = 512     # output features (lane)
TK_PREF = 512     # reduction (lane)
TQ_PREF = 256     # attention query tile
TKV_PREF = 256    # attention key/value tile

VMEM_LIMIT = 48 * 1024 * 1024        # raised scoped limit; safe on every generation
VMEM_TILE_BUDGET = 24 * 1024 * 1024  # per-call budget used to cap tm (v7x-safe)


def _tile_lane(dim, preferred):
    """Largest multiple-of-128 tile <= preferred that evenly divides dim."""
    if dim <= preferred:
        return dim
    t = (preferred // 128) * 128
    while t >= 128:
        if dim % t == 0:
            return t
        t -= 128
    return dim


def _tile_sublane(dim, preferred):
    """Largest multiple-of-16 (else 8) tile <= preferred that divides dim."""
    if dim <= preferred:
        return dim
    for step in (16, 8):
        t = (preferred // step) * step
        while t >= step:
            if dim % t == 0:
                return t
            t -= step
    return dim


def _pick_tm(M, tn, tk, *, out_bytes, has_res, fused):
    """Cap the row tile so double-buffered blocks + f32 accumulator stay inside
    a conservative per-call VMEM budget (v7x has only 64 MiB physical VMEM)."""
    per_row = (2 * tk * 2                    # x block (bf16), double buffered
               + tn * 4                      # f32 accumulator (single buffer)
               + 2 * tn * out_bytes          # output block, double buffered
               + (2 * tn * 4 if has_res else 0)   # f32 residual block
               + (2 * tn * 2 if fused else 0))    # bf16 normalized output
    cap = max(16, int(VMEM_TILE_BUDGET // max(per_row, 1)) // 16 * 16)
    return _tile_sublane(M, min(TM_PREF, cap))


# ----------------------------------------------------------------------------
# shared math helpers (used inside Pallas kernels and in the reference)
# ----------------------------------------------------------------------------
def _erf(x, *, use_eup=False):
    # Abramowitz & Stegun 7.1.26 rational approximation (~1.5e-7 abs err).
    a = jnp.abs(x)
    denom = 1.0 + 0.3275911 * a
    t = pl.reciprocal(denom, approx=True) if use_eup else 1.0 / denom
    poly = t * (0.254829592 + t * (-0.284496736 + t * (1.421413741
               + t * (-1.453152027 + t * 1.061405429))))
    y = 1.0 - poly * jnp.exp(-a * a)
    return jnp.where(x >= 0, y, -y)


def _gelu(x, *, use_eup=False):
    # PyTorch F.gelu default ("exact", erf-based)
    return 0.5 * x * (1.0 + _erf(x * (1.0 / math.sqrt(2.0)), use_eup=use_eup))


def _layernorm_math(v, w, b):
    mu = jnp.mean(v, axis=-1, keepdims=True)
    var = jnp.mean(jnp.square(v - mu), axis=-1, keepdims=True)
    return (v - mu) * lax.rsqrt(var + LN_EPS) * w + b


# ----------------------------------------------------------------------------
# Pallas kernels
# ----------------------------------------------------------------------------
def _layernorm_kernel(x_ref, w_ref, b_ref, o_ref):
    y = _layernorm_math(x_ref[...], w_ref[0], b_ref[0])
    o_ref[...] = y.astype(o_ref.dtype)


def _linear_kernel(*refs, apply_gelu, has_residual, fuse_ln):
    """Tiled y = x @ W + b (+gelu) (+residual) (+fused LayerNorm epilogue).

    grid = (M-tiles, N-tiles, K-tiles), K innermost with f32 VMEM accumulator.
    With fuse_ln the call has two outputs: the f32 residual stream and the
    bf16 normalized activations (LN stats over the full tn == N row).
    """
    x_ref, w_ref, b_ref = refs[0], refs[1], refs[2]
    pos = 3
    res_ref = None
    if has_residual:
        res_ref = refs[pos]
        pos += 1
    lnw_ref = lnb_ref = None
    if fuse_ln:
        lnw_ref, lnb_ref = refs[pos], refs[pos + 1]
        pos += 2
    o_ref = refs[pos]
    pos += 1
    norm_ref = None
    if fuse_ln:
        norm_ref = refs[pos]
        pos += 1
    acc_ref = refs[pos]

    k = pl.program_id(2)

    @pl.when(k == 0)
    def _():
        acc_ref[...] = jnp.zeros(acc_ref.shape, acc_ref.dtype)

    acc_ref[...] += jnp.dot(x_ref[...].astype(COMPUTE_DTYPE),
                            w_ref[...].astype(COMPUTE_DTYPE),
                            preferred_element_type=jnp.float32)

    @pl.when(k == pl.num_programs(2) - 1)
    def _():
        y = acc_ref[...] + b_ref[0]
        if apply_gelu:
            y = _gelu(y, use_eup=True)
        if has_residual:
            y = y + res_ref[...]
        o_ref[...] = y.astype(o_ref.dtype)
        if fuse_ln:
            norm_ref[...] = _layernorm_math(
                y, lnw_ref[0], lnb_ref[0]).astype(norm_ref.dtype)


def _flash_attn_kernel(q_ref, k_ref, v_ref, o_ref, m_sc, l_sc, acc_sc, *, tq, tk):
    """Causal flash attention; heads batched in-block; grid = (B, q, kv).

    Q already carries the 1/sqrt(dh) scale (folded into w_qkv at init).
    Fully-masked kv tiles are skipped (compute via pl.when, DMA via the
    clamped index_map); the causal mask is only generated on diagonal tiles.
    """
    qi = pl.program_id(1)
    ki = pl.program_id(2)

    @pl.when(ki == 0)
    def _():
        m_sc[...] = jnp.full(m_sc.shape, NEG_INF, m_sc.dtype)
        l_sc[...] = jnp.zeros(l_sc.shape, l_sc.dtype)
        acc_sc[...] = jnp.zeros(acc_sc.shape, acc_sc.dtype)

    q_start = qi * tq
    k_start = ki * tk

    def online_softmax_update(apply_mask):
        s = jnp.einsum("hqd,hkd->hqk", q_ref[0], k_ref[0],
                       preferred_element_type=jnp.float32)        # (H,tq,tk)
        if apply_mask:
            rows = q_start + lax.broadcasted_iota(jnp.int32, (tq, tk), 0)
            cols = k_start + lax.broadcasted_iota(jnp.int32, (tq, tk), 1)
            s = jnp.where((cols > rows)[None, :, :], NEG_INF, s)
        m_prev = m_sc[...]
        m_new = jnp.maximum(m_prev, jnp.max(s, axis=-1, keepdims=True))
        alpha = jnp.exp(m_prev - m_new)
        p = jnp.exp(s - m_new)
        l_sc[...] = alpha * l_sc[...] + jnp.sum(p, axis=-1, keepdims=True)
        acc_sc[...] = alpha * acc_sc[...] + jnp.einsum(
            "hqk,hkd->hqd", p.astype(COMPUTE_DTYPE), v_ref[0],
            preferred_element_type=jnp.float32)
        m_sc[...] = m_new

    is_live = k_start <= q_start + (tq - 1)      # tile has at least one unmasked col
    is_full = k_start + (tk - 1) <= q_start      # tile entirely below/at the diagonal

    @pl.when(is_full)
    def _():
        online_softmax_update(apply_mask=False)

    @pl.when(jnp.logical_and(is_live, jnp.logical_not(is_full)))
    def _():
        online_softmax_update(apply_mask=True)

    # NOTE: ki == 0 is always live, so l_sc > 0 at finalize (keeps alpha finite).
    @pl.when(ki == pl.num_programs(2) - 1)
    def _():
        inv_l = pl.reciprocal(l_sc[...], approx=True)
        o_ref[0] = (acc_sc[...] * inv_l).astype(o_ref.dtype)


# ----------------------------------------------------------------------------
# pallas_call wrappers
# ----------------------------------------------------------------------------
def run_layernorm(x, w, b, *, out_dtype):
    M, D = x.shape
    tm = _tile_sublane(M, TM_PREF)
    return pl.pallas_call(
        _layernorm_kernel,
        out_shape=jax.ShapeDtypeStruct((M, D), out_dtype),
        grid=(M // tm,),
        in_specs=[pl.BlockSpec((tm, D), lambda i: (i, 0)),
                  pl.BlockSpec((1, D), lambda i: (0, 0)),
                  pl.BlockSpec((1, D), lambda i: (0, 0))],
        out_specs=pl.BlockSpec((tm, D), lambda i: (i, 0)),
        compiler_params=pltpu.CompilerParams(
            dimension_semantics=("parallel",),
            vmem_limit_bytes=VMEM_LIMIT),
    )(x, w, b)


def run_linear(x, w, b, *, residual=None, apply_gelu=False, ln=None,
               out_dtype, norm_dtype=COMPUTE_DTYPE):
    """y = x @ w + b (+gelu) (+residual). If ln=(ln_w, ln_b) is given the call
    also returns LayerNorm(y) (fused epilogue; requires tn == N)."""
    M, K = x.shape
    Kw, N = w.shape
    assert K == Kw
    fuse_ln = ln is not None
    has_res = residual is not None

    tn = N if fuse_ln else _tile_lane(N, TN_PREF)     # LN stats need the full row
    tk = _tile_lane(K, TK_PREF)
    tm = _pick_tm(M, tn, tk, out_bytes=jnp.dtype(out_dtype).itemsize,
                  has_res=has_res, fused=fuse_ln)
    grid = (M // tm, N // tn, K // tk)

    in_specs = [pl.BlockSpec((tm, tk), lambda i, j, k: (i, k)),
                pl.BlockSpec((tk, tn), lambda i, j, k: (k, j)),
                pl.BlockSpec((1, tn), lambda i, j, k: (0, j))]
    args = [x, w, b]
    if has_res:
        in_specs.append(pl.BlockSpec((tm, tn), lambda i, j, k: (i, j)))
        args.append(residual)
    if fuse_ln:
        in_specs.append(pl.BlockSpec((1, N), lambda i, j, k: (0, 0)))
        in_specs.append(pl.BlockSpec((1, N), lambda i, j, k: (0, 0)))
        args.extend(ln)

    out_block = pl.BlockSpec((tm, tn), lambda i, j, k: (i, j))
    if fuse_ln:
        out_shape = (jax.ShapeDtypeStruct((M, N), out_dtype),
                     jax.ShapeDtypeStruct((M, N), norm_dtype))
        out_specs = (out_block, pl.BlockSpec((tm, tn), lambda i, j, k: (i, j)))
    else:
        out_shape = jax.ShapeDtypeStruct((M, N), out_dtype)
        out_specs = out_block

    kernel = functools.partial(_linear_kernel, apply_gelu=apply_gelu,
                               has_residual=has_res, fuse_ln=fuse_ln)
    return pl.pallas_call(
        kernel,
        out_shape=out_shape,
        grid=grid,
        in_specs=in_specs,
        out_specs=out_specs,
        scratch_shapes=[pltpu.VMEM((tm, tn), jnp.float32)],
        compiler_params=pltpu.CompilerParams(
            dimension_semantics=("parallel", "parallel", "arbitrary"),
            vmem_limit_bytes=VMEM_LIMIT),
    )(*args)


def run_flash_attention(q, k, v):
    B, H, S, dh = q.shape
    tq = _tile_sublane(S, TQ_PREF)
    tk = _tile_sublane(S, TKV_PREF)
    grid = (B, S // tq, S // tk)

    def q_map(b, qi, ki):
        return (b, 0, qi, 0)

    def kv_map(b, qi, ki):
        # Clamp dead (fully-above-diagonal) kv tiles to the last live tile so
        # the block index does not change and Pallas skips the K/V DMA.
        last_live = (qi * tq + (tq - 1)) // tk
        return (b, 0, jnp.minimum(ki, last_live), 0)

    q_spec = pl.BlockSpec((1, H, tq, dh), q_map)
    kv_spec = pl.BlockSpec((1, H, tk, dh), kv_map)
    o_spec = pl.BlockSpec((1, H, tq, dh), q_map)

    kernel = functools.partial(_flash_attn_kernel, tq=tq, tk=tk)
    return pl.pallas_call(
        kernel,
        out_shape=jax.ShapeDtypeStruct((B, H, S, dh), q.dtype),
        grid=grid,
        in_specs=[q_spec, kv_spec, kv_spec],
        out_specs=o_spec,
        scratch_shapes=[pltpu.VMEM((H, tq, 1), jnp.float32),
                        pltpu.VMEM((H, tq, 1), jnp.float32),
                        pltpu.VMEM((H, tq, dh), jnp.float32)],
        compiler_params=pltpu.CompilerParams(
            dimension_semantics=("parallel", "parallel", "arbitrary"),
            vmem_limit_bytes=VMEM_LIMIT),
    )(q, k, v)


# ----------------------------------------------------------------------------
# model forward
# ----------------------------------------------------------------------------
def gpt_forward(ids, params, cfg):
    V = cfg["vocab_size"]
    D = cfg["d_model"]
    H = cfg["n_heads"]
    dh = D // H
    B, S = ids.shape
    M = B * S
    Vstore = params["tok_emb"].shape[0]
    P = params["pos_emb"].shape[0]

    ids = jnp.clip(ids, 0, Vstore - 1)                     # token-id clamp
    pos = jnp.clip(jnp.arange(S), 0, P - 1)                # position clamp
    x = params["tok_emb"][ids] + params["pos_emb"][pos][None]   # (B,S,D) f32
    x2d = x.reshape(M, D).astype(jnp.float32)

    layers = params["layers"]
    n_layers = len(layers)

    # Only the very first LayerNorm is standalone; all later LNs are fused into
    # the preceding matmul epilogue (out-proj -> ln_2, fc2 -> next ln_1 / ln_f).
    h = run_layernorm(x2d, layers[0]["ln1_w"], layers[0]["ln1_b"],
                      out_dtype=COMPUTE_DTYPE)

    for i, lp in enumerate(layers):
        # ---- attention sub-block ----
        qkv = run_linear(h, lp["w_qkv"], lp["b_qkv"], out_dtype=COMPUTE_DTYPE)
        qkv = qkv.reshape(B, S, 3, H, dh)
        q = jnp.transpose(qkv[:, :, 0], (0, 2, 1, 3))      # (B,H,S,dh) bf16
        k = jnp.transpose(qkv[:, :, 1], (0, 2, 1, 3))
        v = jnp.transpose(qkv[:, :, 2], (0, 2, 1, 3))
        attn = run_flash_attention(q, k, v)                 # (B,H,S,dh) bf16
        attn2d = jnp.transpose(attn, (0, 2, 1, 3)).reshape(M, D)

        # out-proj + residual, with ln_2 fused into the epilogue
        x2d, h2 = run_linear(attn2d, lp["w_o"], lp["b_o"], residual=x2d,
                             ln=(lp["ln2_w"], lp["ln2_b"]),
                             out_dtype=jnp.float32)

        # ---- MLP sub-block ----
        h1 = run_linear(h2, lp["w1"], lp["b1"], apply_gelu=True,
                        out_dtype=COMPUTE_DTYPE)
        if i + 1 < n_layers:
            next_ln = (layers[i + 1]["ln1_w"], layers[i + 1]["ln1_b"])
        else:
            next_ln = (params["ln_f_w"], params["ln_f_b"])
        x2d, h = run_linear(h1, lp["w2"], lp["b2"], residual=x2d,
                            ln=next_ln, out_dtype=jnp.float32)

    # h already holds ln_f(x) (fused into the last fc2). lm_head weights are
    # vocab-padded to a multiple of 128; slice the real vocab afterwards.
    logits = run_linear(h, params["w_lm"], params["b_lm"], out_dtype=jnp.float32)
    return logits[:, :V].reshape(B, S, V)


# ----------------------------------------------------------------------------
# deterministic parameter init (mirrors module __init__ / _init_weights)
# ----------------------------------------------------------------------------
def xavier_uniform(key, shape):
    fan_out, fan_in = shape
    bound = math.sqrt(6.0 / (fan_in + fan_out))
    return jax.random.uniform(key, shape, jnp.float32, -bound, bound)


def init_params(key, cfg):
    D, F, V, P = cfg["d_model"], cfg["d_ff"], cfg["vocab_size"], cfg["max_seq_len"]
    H = cfg["n_heads"]
    dh = D // H
    n_layers = cfg["n_layers"]
    Vp = ((V + 127) // 128) * 128        # pad vocab -> lane-dense lm_head tiles
    q_scale = 1.0 / math.sqrt(dh)        # folded into the Q projection columns
    keys = iter(jax.random.split(key, 3 + 4 * n_layers))
    wdt = COMPUTE_DTYPE

    tok_emb = xavier_uniform(next(keys), (V, D))
    pos_emb = xavier_uniform(next(keys), (P, D))
    w_lm = jnp.zeros((D, Vp), jnp.float32).at[:, :V].set(
        xavier_uniform(next(keys), (V, D)).T)

    params = {
        "tok_emb": tok_emb,
        "pos_emb": pos_emb,
        "ln_f_w": jnp.ones((1, D), jnp.float32),
        "ln_f_b": jnp.zeros((1, D), jnp.float32),
        "w_lm": w_lm.astype(wdt),                       # (D, Vp)
        "b_lm": jnp.zeros((1, Vp), jnp.float32),
        "layers": [],
    }
    for _ in range(n_layers):
        w_qkv = xavier_uniform(next(keys), (3 * D, D)).T            # (D, 3D)
        w_qkv = w_qkv.at[:, :D].multiply(q_scale)                   # fold 1/sqrt(dh)
        params["layers"].append({
            "ln1_w": jnp.ones((1, D), jnp.float32),
            "ln1_b": jnp.zeros((1, D), jnp.float32),
            "w_qkv": w_qkv.astype(wdt),
            "b_qkv": jnp.zeros((1, 3 * D), jnp.float32),  # zero bias: scale fold is a no-op
            "w_o": xavier_uniform(next(keys), (D, D)).T.astype(wdt),
            "b_o": jnp.zeros((1, D), jnp.float32),
            "ln2_w": jnp.ones((1, D), jnp.float32),
            "ln2_b": jnp.zeros((1, D), jnp.float32),
            "w1": xavier_uniform(next(keys), (F, D)).T.astype(wdt),  # (D, F)
            "b1": jnp.zeros((1, F), jnp.float32),
            "w2": xavier_uniform(next(keys), (D, F)).T.astype(wdt),  # (F, D)
            "b2": jnp.zeros((1, D), jnp.float32),
        })
    return params


# ----------------------------------------------------------------------------
# pure-JAX reference with matching numerics (bf16 matmul inputs, f32 accum)
# ----------------------------------------------------------------------------
def reference_forward(ids, params, cfg):
    V = cfg["vocab_size"]
    Vstore, P = params["tok_emb"].shape[0], params["pos_emb"].shape[0]
    D, H = cfg["d_model"], cfg["n_heads"]
    dh = D // H
    B, S = ids.shape
    cd, f32 = COMPUTE_DTYPE, jnp.float32

    ids = jnp.clip(ids, 0, Vstore - 1)
    pos = jnp.clip(jnp.arange(S), 0, P - 1)
    x = params["tok_emb"][ids] + params["pos_emb"][pos][None]
    mask = jnp.triu(jnp.ones((S, S), bool), 1)

    def mm(a, w, b):
        return jnp.dot(a.astype(cd), w.astype(cd),
                       preferred_element_type=f32) + b[0]

    for lp in params["layers"]:
        h = _layernorm_math(x, lp["ln1_w"][0], lp["ln1_b"][0]).astype(cd)
        qkv = mm(h, lp["w_qkv"], lp["b_qkv"]).astype(cd)
        qkv = qkv.reshape(B, S, 3, H, dh)
        q = jnp.transpose(qkv[:, :, 0], (0, 2, 1, 3))   # already 1/sqrt(dh)-scaled
        k = jnp.transpose(qkv[:, :, 1], (0, 2, 1, 3))
        v = jnp.transpose(qkv[:, :, 2], (0, 2, 1, 3))
        s = jnp.einsum("bhqd,bhkd->bhqk", q, k, preferred_element_type=f32)
        s = jnp.where(mask, NEG_INF, s)
        p = jax.nn.softmax(s, axis=-1)
        o = jnp.einsum("bhqk,bhkd->bhqd", p.astype(cd), v,
                       preferred_element_type=f32).astype(cd)
        o = jnp.transpose(o, (0, 2, 1, 3)).reshape(B, S, D)
        x = x + mm(o, lp["w_o"], lp["b_o"])
        h2 = _layernorm_math(x, lp["ln2_w"][0], lp["ln2_b"][0]).astype(cd)
        h1 = _gelu(mm(h2, lp["w1"], lp["b1"])).astype(cd)
        x = x + mm(h1, lp["w2"], lp["b2"])

    xf = _layernorm_math(x, params["ln_f_w"][0], params["ln_f_b"][0]).astype(cd)
    return mm(xf, params["w_lm"], params["b_lm"])[:, :, :V]


if __name__ == "__main__":
    cfg = dict(vocab_size=64, d_model=32, n_layers=2, n_heads=4, d_ff=64,
               max_seq_len=16, dropout=0.1)
    key = jax.random.PRNGKey(0)
    pkey, ikey = jax.random.split(key)
    params = init_params(pkey, cfg)

    # batch=2, seq=8; some ids >= vocab_size to exercise the clamp path
    ids = jax.random.randint(ikey, (2, 8), 0, 100, dtype=jnp.int32)

    logits = gpt_forward(ids, params, cfg)
    jax.block_until_ready(logits)

    ref = reference_forward(ids, params, cfg)
    assert logits.shape == (2, 8, cfg["vocab_size"])
    max_err = float(jnp.max(jnp.abs(logits - ref)))
    assert jnp.allclose(logits, ref, atol=2e-2, rtol=2e-2), max_err

    print("KERNEL_OK")
</pallas_src>

<mosaic_0001>
module attributes {stable_mosaic.version = 11 : i64} {
  func.func @_layernorm_kernel(%arg0: i32, %arg1: memref<16x32xf32, #tpu.memory_space<vmem>>, %arg2: memref<1x32xf32, #tpu.memory_space<vmem>>, %arg3: memref<1x32xf32, #tpu.memory_space<vmem>>, %arg4: memref<16x32xbf16, #tpu.memory_space<vmem>>) attributes {dimension_semantics = [#tpu.dimension_semantics<parallel>], iteration_bounds = array<i64: 1>, scalar_prefetch = 0 : i64, scratch_operands = 0 : i64, tpu.core_type = #tpu.core_type<tc>, window_params = [{transform_indices = @transform_0, window_bounds = array<i64: 16, 32>}, {pipeline_mode = #tpu.pipeline_mode<synchronous>, transform_indices = @transform_1, window_bounds = array<i64: 1, 32>}, {pipeline_mode = #tpu.pipeline_mode<synchronous>, transform_indices = @transform_2, window_bounds = array<i64: 1, 32>}, {transform_indices = @transform_3, window_bounds = array<i64: 16, 32>}]} {
    %c0 = arith.constant 0 : index
    %c0_0 = arith.constant 0 : index
    %0 = vector.load %arg1[%c0, %c0_0] : memref<16x32xf32, #tpu.memory_space<vmem>>, vector<16x32xf32>
    %c0_1 = arith.constant 0 : index
    %c0_2 = arith.constant 0 : index
    %1 = vector.load %arg2[%c0_1, %c0_2] : memref<1x32xf32, #tpu.memory_space<vmem>>, vector<1x32xf32>
    %2 = vector.shape_cast %1 : vector<1x32xf32> to vector<32xf32>
    %c0_3 = arith.constant 0 : index
    %c0_4 = arith.constant 0 : index
    %3 = vector.load %arg3[%c0_3, %c0_4] : memref<1x32xf32, #tpu.memory_space<vmem>>, vector<1x32xf32>
    %4 = vector.shape_cast %3 : vector<1x32xf32> to vector<32xf32>
    %cst = arith.constant dense<0.000000e+00> : vector<16xf32>
    %5 = vector.multi_reduction <add>, %0, %cst [1] : vector<16x32xf32> to vector<16xf32>
    %6 = vector.shape_cast %5 : vector<16xf32> to vector<16x1xf32>
    %cst_5 = arith.constant 3.200000e+01 : f32
    %7 = vector.broadcast %cst_5 : f32 to vector<16x1xf32>
    %8 = arith.divf %6, %7 : vector<16x1xf32>
    %9 = vector.broadcast %8 : vector<16x1xf32> to vector<16x32xf32>
    %10 = arith.subf %0, %9 : vector<16x32xf32>
    %11 = arith.mulf %10, %10 : vector<16x32xf32>
    %cst_6 = arith.constant dense<0.000000e+00> : vector<16xf32>
    %12 = vector.multi_reduction <add>, %11, %cst_6 [1] : vector<16x32xf32> to vector<16xf32>
    %13 = vector.shape_cast %12 : vector<16xf32> to vector<16x1xf32>
    %cst_7 = arith.constant 3.200000e+01 : f32
    %14 = vector.broadcast %cst_7 : f32 to vector<16x1xf32>
    %15 = arith.divf %13, %14 : vector<16x1xf32>
    %16 = vector.broadcast %8 : vector<16x1xf32> to vector<16x32xf32>
    %17 = arith.subf %0, %16 : vector<16x32xf32>
    %cst_8 = arith.constant 9.99999974E-6 : f32
    %18 = vector.broadcast %cst_8 : f32 to vector<16x1xf32>
    %19 = arith.addf %15, %18 : vector<16x1xf32>
    %20 = math.rsqrt %19 : vector<16x1xf32>
    %21 = vector.broadcast %20 : vector<16x1xf32> to vector<16x32xf32>
    %22 = arith.mulf %17, %21 : vector<16x32xf32>
    %23 = vector.shape_cast %2 : vector<32xf32> to vector<1x32xf32>
    %24 = vector.broadcast %23 : vector<1x32xf32> to vector<16x32xf32>
    %25 = arith.mulf %22, %24 : vector<16x32xf32>
    %26 = vector.shape_cast %4 : vector<32xf32> to vector<1x32xf32>
    %27 = vector.broadcast %26 : vector<1x32xf32> to vector<16x32xf32>
    %28 = arith.addf %25, %27 : vector<16x32xf32>
    %29 = arith.truncf %28 : vector<16x32xf32> to vector<16x32xbf16>
    %c0_9 = arith.constant 0 : index
    %c0_10 = arith.constant 0 : index
    %30 = vector.load %arg4[%c0_9, %c0_10] : memref<16x32xbf16, #tpu.memory_space<vmem>>, vector<16x32xbf16>
    tpu.vector_store %arg4[%c0_9, %c0_10], %29 {strides = array<i32>} : memref<16x32xbf16, #tpu.memory_space<vmem>>, vector<16x32xbf16>,
    return
  }
  func.func @transform_0(%arg0: i32) -> (i32, i32) {
    %c0_i32 = arith.constant 0 : i32
    %c0_i32_0 = arith.constant 0 : i32
    return %arg0, %c0_i32 : i32, i32
  }
  func.func @transform_1(%arg0: i32) -> (i32, i32) {
    %c0_i32 = arith.constant 0 : i32
    %c0_i32_0 = arith.constant 0 : i32
    %c0_i32_1 = arith.constant 0 : i32
    return %c0_i32, %c0_i32_0 : i32, i32
  }
  func.func @transform_2(%arg0: i32) -> (i32, i32) {
    %c0_i32 = arith.constant 0 : i32
    %c0_i32_0 = arith.constant 0 : i32
    %c0_i32_1 = arith.constant 0 : i32
    return %c0_i32, %c0_i32_0 : i32, i32
  }
  func.func @transform_3(%arg0: i32) -> (i32, i32) {
    %c0_i32 = arith.constant 0 : i32
    %c0_i32_0 = arith.constant 0 : i32
    return %arg0, %c0_i32 : i32, i32
  }
}

</mosaic_0001>

<llo_original>
// kernel: tpu_custom_call.1
$region0: #{tpu_custom_call.1}
  #allocation0 [shape = 'u32[]', space=smem, size = 0x4, offset = 0x4, fixed_abs, tag = 'smem constant byte address 0x4 - core index']
  #allocation1 [shape = 'u32[144,128]{1,0:T(1,128)}', space=vmem, size = 0x12000, scoped, tag = 'internal scratch']
  %s0 = inlined_call_operand.hbm [shape: f32[16,32], index: 0, kind: input, shape index: {}]
  %s1 = inlined_call_operand.vmem [shape: f32[1,32], index: 1, kind: input, shape index: {}]
  %s2 = inlined_call_operand.vmem [shape: f32[1,32], index: 2, kind: input, shape index: {}]
  %s3 = inlined_call_operand.hbm [shape: bf16[16,32], index: 3, kind: output, shape index: {}]
  %s4 = sld [smem:[#allocation0]]
  $region26: #{tpu_custom_call.1} parent=0
    _
  %s6 = ssub.s32 1, %s4
  %s7 = scalar_select 0, %s6, %s4
  $region1: #{tpu_custom_call.1} parent=0
    #allocation2 [shape = 'u8[8192]{0}', space=vmem, size = 0x2000, scoped, tag = 'input window, operand 0, single buffered']
    #allocation3 [shape = 's32[1]{0}', space=sflag, size = 0x4, scoped, tag = 'scoped memory for tpu_custom_call.1']
    #allocation4 [shape = 's32[1]{0}', space=sflag, size = 0x4, scoped, tag = 'scoped memory for tpu_custom_call.1']
    #allocation5 [shape = 'u8[4096]{0}', space=vmem, size = 0x1000, scoped, tag = 'output window, operand 0, single buffered']
    %8 = vsyncpa [#allocation3], 0
    %9 = vsyncpa [#allocation4], 0
    // Predicated region
    $region2: #{tpu_custom_call.1} parent=1 // pred_check
      _
    $region3: #{tpu_custom_call.1} parent=1 // pred_check_branch
      %11 = sbr.rel (0) target = $region5
    $region4: #{tpu_custom_call.1} parent=1 // pred_region
      %s13 = ssub.s32 256, 256
      %14 = vsyncadd [#allocation3], %s13
      %s15 = sshll.u32 [#allocation2], 4
      %s16 = int_to_ptr.vmem [resolvable:$true] %s15
      %21 = dma.hbm_to_vmem [thread:$0]  %s0, 256, %s16, [#allocation3], 128, 128, 8
    $region5: #{tpu_custom_call.1} parent=1 // pred_fallthru
      _
    // Predicated region
    $region6: #{tpu_custom_call.1} parent=1 // pred_check
      _
    $region7: #{tpu_custom_call.1} parent=1 // pred_check_branch
      %23 = sbr.rel (0) target = $region9
    $region8: #{tpu_custom_call.1} parent=1 // pred_region
      _
    $region9: #{tpu_custom_call.1} parent=1 // pred_fallthru
      _
    // Predicated region
    $region10: #{tpu_custom_call.1} parent=1 // pred_check
      _
    $region11: #{tpu_custom_call.1} parent=1 // pred_check_branch
      %25 = sbr.rel (0) target = $region13
    $region12: #{tpu_custom_call.1} parent=1 // pred_region
      _
    $region13: #{tpu_custom_call.1} parent=1 // pred_fallthru
      _
    // Predicated region
    $region14: #{tpu_custom_call.1} parent=1 // pred_check
      _
    $region15: #{tpu_custom_call.1} parent=1 // pred_check_branch
      %27 = sbr.rel (0) target = $region17
    $region16: #{tpu_custom_call.1} parent=1 // pred_region
      %28 = dma.done [#allocation3], 256
    $region17: #{tpu_custom_call.1} parent=1 // pred_fallthru
      _
    %v29 = vld [vmem:[#allocation2] sm:$0xff]
    %v30 = vld [vmem:[#allocation2 + $0x8] sm:$0xff]
    %v31 = vld [vmem:[%s1] sm:$0x1]
    %v32 = vld [vmem:[%s2] sm:$0x1]
    %vm33 = vcmask 261120
    %v34 = vsel %vm33, %v29, 0.0
    %35 = vadd.xlane.f32.xlu0 %v34
    %v36 = vpop.xlane.xlu0 %35
    %v37 = vsel %vm33, %v30, 0.0
    %38 = vadd.xlane.f32.xlu0 %v37
    %v39 = vpop.xlane.xlu0 %38
    %v40 = vrcp.pop 32.0
    %v41 = vmul.f32 %v36, %v40
    %v42 = vmul.f32 %v39, %v40
    %v43 = vsub.f32 %v29, %v41
    %v44 = vsub.f32 %v30, %v42
    %v45 = vmul.f32 %v43, %v43
    %v46 = vmul.f32 %v44, %v44
    %v47 = vsel %vm33, %v45, 0.0
    %48 = vadd.xlane.f32.xlu0 %v47
    %v49 = vpop.xlane.xlu0 %48
    %v50 = vsel %vm33, %v46, 0.0
    %51 = vadd.xlane.f32.xlu0 %v50
    %v52 = vpop.xlane.xlu0 %51
    %v53 = vmul.f32 %v49, %v40
    %v54 = vmul.f32 %v52, %v40
    %v55 = vadd.f32 %v53, 1e-05
    %v56 = vadd.f32 %v54, 1e-05
    %v57 = vrsqrt.pop %v55
    %v58 = vrsqrt.pop %v56
    %v59 = vmul.f32 %v43, %v57
    %v60 = vmul.f32 %v44, %v58
    %v62 = vlaneseq
    %v63 = vshrl.u32 %v62, 7
    %v64 = vsub.s32 0, %v63
    %v65 = vrot.slane %v31, %v64
    %v67 = vmul.f32 %v59, %v65
    %v68 = vmul.f32 %v60, %v65
    %v70 = vlaneseq
    %v71 = vshrl.u32 %v70, 7
    %v72 = vsub.s32 0, %v71
    %v73 = vrot.slane %v32, %v72
    %v75 = vadd.f32 %v67, %v73
    %v76 = vadd.f32 %v68, %v73
    %v77 = vpack.c.bf16 %v76, %v75
    %v79 = vunpack.c.l.b16 %v77
    %v80 = vunpack.c.h.b16 %v77
    %v81 = vpack.c.b16 %v79, %v79
    %v82 = vpack.c.b16 %v80, %v80
    %vm85 = vcmask 257024
    %86 = vst.msk [vmem:[#allocation5] sm:$0xf] %vm85, %v81
    %87 = vst.msk [vmem:[#allocation5 + $0x4] sm:$0xf] %vm85, %v82
    // Predicated region
    $region18: #{tpu_custom_call.1} parent=1 // pred_check
      _
    $region19: #{tpu_custom_call.1} parent=1 // pred_check_branch
      %89 = sbr.rel (0) target = $region21
    $region20: #{tpu_custom_call.1} parent=1 // pred_region
      %s91 = ssub.s32 128, 128
      %92 = vsyncadd [#allocation4], %s91
      %s93 = sshll.u32 [#allocation5], 4
      %s94 = int_to_ptr.vmem [resolvable:$true] %s93
      %99 = dma.vmem_to_hbm [thread:$0]  %s94, 128, %s3, [#allocation4], 64, 64, 4
    $region21: #{tpu_custom_call.1} parent=1 // pred_fallthru
      _
    // Predicated region
    $region22: #{tpu_custom_call.1} parent=1 // pred_check
      _
    $region23: #{tpu_custom_call.1} parent=1 // pred_check_branch
      %101 = sbr.rel (0) target = $region25
    $region24: #{tpu_custom_call.1} parent=1 // pred_region
      %102 = dma.done [#allocation4], 128
    $region25: #{tpu_custom_call.1} parent=1 // pred_fallthru
      _
    %103 = vsyncpa [#allocation3], 1
    %104 = vsyncpa [#allocation4], 1

</llo_original>
